<compile_context>
chip_gen: v7x
topology: tpu7x:2x2x1
jax: 0.10.0
libtpu: 0.0.40
codegen_flags: <defaults>
</compile_context>

<pallas_src>
import jax
import jax.numpy as jnp
from jax.experimental import pallas as pl
from jax.experimental.pallas import tpu as pltpu

# Batch tile used only when the batch is large enough to justify a grid;
# small batches (like the test below) run as a single full-array block.
_TILE_B = 1024


def _dqn_fused_kernel(x_ref, p_ref, o_ref):
    # Single MXU pass: y = x @ W_eff + b_eff   (exact fusion of f2 then f4)
    x = x_ref[...]                       # (B_tile, 4) f32
    w = p_ref[0:4, :]                    # (4, 4)   already (in, out) layout
    b = p_ref[4:5, :]                    # (1, 4)   broadcasts over rows
    y = jnp.dot(x, w, preferred_element_type=jnp.float32) + b
    o_ref[...] = y.astype(o_ref.dtype)


def _pack_params(w2, b2, w4, b4):
    """Fuse the two Linear layers into a single packed (5, 4) f32 operand."""
    w_eff = (w4 @ w2).T                  # (in=4, out=4), pre-transposed
    b_eff = b2 @ w4.T + b4               # (4,)
    return jnp.concatenate([w_eff, b_eff.reshape(1, 4)], axis=0)  # (5, 4)


def dqn_single2_forward(x, w2, b2, w4, b4):
    """Pallas forward for DQN_single2: Linear(4,4) -> Linear(4,4), no activation."""
    B, _ = x.shape
    params = _pack_params(w2, b2, w4, b4)

    if B >= _TILE_B and B % _TILE_B == 0:
        # Lane/grid path for realistic replay-buffer batches: tile the batch
        # axis and shard it across cores ("parallel"); params are broadcast.
        return pl.pallas_call(
            _dqn_fused_kernel,
            out_shape=jax.ShapeDtypeStruct((B, 4), x.dtype),
            grid=(B // _TILE_B,),
            in_specs=[
                pl.BlockSpec((_TILE_B, 4), lambda i: (i, 0)),   # x tile
                pl.BlockSpec((5, 4), lambda i: (0, 0)),         # packed params
            ],
            out_specs=pl.BlockSpec((_TILE_B, 4), lambda i: (i, 0)),
            compiler_params=pltpu.CompilerParams(
                dimension_semantics=("parallel",)),
        )(x, params)

    # Tiny-batch path: everything fits in a single full-array VMEM block,
    # no grid, 2 input DMAs total, one matmul, one bias add.
    return pl.pallas_call(
        _dqn_fused_kernel,
        out_shape=jax.ShapeDtypeStruct((B, 4), x.dtype),
        in_specs=[
            pl.BlockSpec(memory_space=pltpu.VMEM),   # x
            pl.BlockSpec(memory_space=pltpu.VMEM),   # packed (5,4) params
        ],
        out_specs=pl.BlockSpec(memory_space=pltpu.VMEM),
    )(x, params)


def init_params(key):
    # Deterministic init mimicking PyTorch nn.Linear default:
    # U(-1/sqrt(fan_in), 1/sqrt(fan_in)) with fan_in = 4.
    bound = 1.0 / jnp.sqrt(4.0)
    k2w, k2b, k4w, k4b = jax.random.split(key, 4)
    w2 = jax.random.uniform(k2w, (4, 4), jnp.float32, -bound, bound)
    b2 = jax.random.uniform(k2b, (4,), jnp.float32, -bound, bound)
    w4 = jax.random.uniform(k4w, (4, 4), jnp.float32, -bound, bound)
    b4 = jax.random.uniform(k4b, (4,), jnp.float32, -bound, bound)
    return w2, b2, w4, b4


def _reference(x, w2, b2, w4, b4):
    # Same math as the PyTorch module: f4(f2(x)) with PyTorch x @ W.T + b.
    return (x @ w2.T + b2) @ w4.T + b4


if __name__ == "__main__":
    key = jax.random.PRNGKey(0)
    kx, kp, kx_big = jax.random.split(key, 3)

    w2, b2, w4, b4 = init_params(kp)

    # Small-batch path (matches the module's typical single-transition use).
    batch = 8
    x = jax.random.normal(kx, (batch, 4), jnp.float32)
    out = jax.block_until_ready(dqn_single2_forward(x, w2, b2, w4, b4))
    ref = _reference(x, w2, b2, w4, b4)
    assert out.shape == (batch, 4)
    assert jnp.allclose(out, ref, atol=1e-5, rtol=1e-5)

    # Gridded / batch-tiled path (replay-buffer sized batch).
    big_batch = 2 * _TILE_B
    x_big = jax.random.normal(kx_big, (big_batch, 4), jnp.float32)
    out_big = jax.block_until_ready(dqn_single2_forward(x_big, w2, b2, w4, b4))
    ref_big = _reference(x_big, w2, b2, w4, b4)
    assert out_big.shape == (big_batch, 4)
    assert jnp.allclose(out_big, ref_big, atol=1e-5, rtol=1e-5)

    print("KERNEL_OK")
</pallas_src>

<mosaic_0001>
module attributes {stable_mosaic.version = 11 : i64} {
  func.func @_dqn_fused_kernel(%arg0: memref<8x4xf32, #tpu.memory_space<vmem>>, %arg1: memref<5x4xf32, #tpu.memory_space<vmem>>, %arg2: memref<8x4xf32, #tpu.memory_space<vmem>>) attributes {dimension_semantics = [], scalar_prefetch = 0 : i64, scratch_operands = 0 : i64, tpu.core_type = #tpu.core_type<tc>} {
    %c0 = arith.constant 0 : index
    %c0_0 = arith.constant 0 : index
    %0 = vector.load %arg0[%c0, %c0_0] : memref<8x4xf32, #tpu.memory_space<vmem>>, vector<8x4xf32>
    %c0_1 = arith.constant 0 : index
    %c0_2 = arith.constant 0 : index
    %1 = vector.load %arg1[%c0_1, %c0_2] : memref<5x4xf32, #tpu.memory_space<vmem>>, vector<4x4xf32>
    %c4 = arith.constant 4 : index
    %c0_3 = arith.constant 0 : index
    %2 = vector.load %arg1[%c4, %c0_3] : memref<5x4xf32, #tpu.memory_space<vmem>>, vector<1x4xf32>
    %cst = arith.constant dense<0.000000e+00> : vector<8x4xf32>
    %3 = tpu.matmul %0, %1, %cst {dimension_numbers = #tpu.dot_dimension_numbers<[1], [0], [0], [1], [0, 0, 1, 1], [], []>} : vector<8x4xf32>, vector<4x4xf32>, vector<8x4xf32> -> vector<8x4xf32>
    %4 = vector.broadcast %2 : vector<1x4xf32> to vector<8x4xf32>
    %5 = arith.addf %3, %4 : vector<8x4xf32>
    %c0_4 = arith.constant 0 : index
    %c0_5 = arith.constant 0 : index
    %6 = vector.load %arg2[%c0_4, %c0_5] : memref<8x4xf32, #tpu.memory_space<vmem>>, vector<8x4xf32>
    tpu.vector_store %arg2[%c0_4, %c0_5], %5 {strides = array<i32>} : memref<8x4xf32, #tpu.memory_space<vmem>>, vector<8x4xf32>,
    return
  }
}

</mosaic_0001>

<llo_original>
// kernel: tpu_custom_call.1
$region0: #{tpu_custom_call.1}
  #allocation0 [shape = 'u32[]', space=smem, size = 0x4, offset = 0x4, fixed_abs, tag = 'smem constant byte address 0x4 - core index']
  #allocation1 [shape = 'u32[144,128]{1,0:T(1,128)}', space=vmem, size = 0x12000, scoped, tag = 'internal scratch']
  %s0 = inlined_call_operand.vmem [shape: f32[8,4], index: 0, kind: input, shape index: {}]
  %s1 = inlined_call_operand.vmem [shape: f32[5,4], index: 1, kind: input, shape index: {}]
  %s2 = inlined_call_operand.vmem [shape: f32[8,4], index: 2, kind: output, shape index: {}]
  %s3 = sld [smem:[#allocation0]]
  $region18: #{tpu_custom_call.1} parent=0
    _
  %s5 = ssub.s32 1, %s3
  %s6 = scalar_select 0, %s5, %s3
  // Predicated region
  $region2: #{tpu_custom_call.1} parent=0 // pred_check
    _
  $region3: #{tpu_custom_call.1} parent=0 // pred_check_branch
    %8 = sbr.rel (0) target = $region5
  $region4: #{tpu_custom_call.1} parent=0 // pred_region
    _
  $region5: #{tpu_custom_call.1} parent=0 // pred_fallthru
    _
  // Predicated region
  $region6: #{tpu_custom_call.1} parent=0 // pred_check
    _
  $region7: #{tpu_custom_call.1} parent=0 // pred_check_branch
    %10 = sbr.rel (0) target = $region9
  $region8: #{tpu_custom_call.1} parent=0 // pred_region
    _
  $region9: #{tpu_custom_call.1} parent=0 // pred_fallthru
    _
  %v11 = vld [vmem:[%s0] sm:$0xff]
  %v12 = vld [vmem:[%s1] sm:$0xf]
  %v13 = vld [vmem:[%s1 + $0x4] sm:$0x1]
  %v14 = vlaneseq
  %v15 = vshrl.u32 %v14, 7
  %v16 = vsub.s32 0, %v15
  %v17 = vrot.slane %v13, %v16
  %vm18 = vcmask 31744
  %v20 = vsel %vm18, %v11, 0
  %vm22 = vcmask 1043456
  %v24 = vsel %vm22, %v12, 0
  %26 = vmatprep.subr.mxu0 0.0
  %27 = vmatpush1.msra.mxu0 %v24
  %28 = vmatprep.subr.mxu0 0.0
  %29 = vmatpush1.msra.mxu0 0.0
  %30 = vmatprep.subr.mxu0 0.0
  %31 = vmatpush1.msra.mxu0 0.0
  %32 = vmatprep.subr.mxu0 0.0
  %33 = vmatpush1.msra.mxu0 0.0
  %34 = vmatprep.subr.mxu0 0.0
  %35 = vmatpush1.msra.mxu0 0.0
  %36 = vmatprep.subr.mxu0 0.0
  %37 = vmatpush1.msra.mxu0 0.0
  %38 = vmatprep.subr.mxu0 0.0
  %39 = vmatpush1.msra.mxu0 0.0
  %40 = vmatprep.subr.mxu0 0.0
  %41 = vmatpush1.msra.mxu0 0.0
  %42 = vmatprep.subr.mxu0 0.0
  %43 = vmatpush1.msra.mxu0 0.0
  %44 = vmatprep.subr.mxu0 0.0
  %45 = vmatpush1.msra.mxu0 0.0
  %46 = vmatprep.subr.mxu0 0.0
  %47 = vmatpush1.msra.mxu0 0.0
  %48 = vmatprep.subr.mxu0 0.0
  %49 = vmatpush1.msra.mxu0 0.0
  %50 = vmatprep.subr.mxu0 0.0
  %51 = vmatpush1.msra.mxu0 0.0
  %52 = vmatprep.subr.mxu0 0.0
  %53 = vmatpush1.msra.mxu0 0.0
  %54 = vmatprep.subr.mxu0 0.0
  %55 = vmatpush1.msra.mxu0 0.0
  %56 = vmatprep.subr.mxu0 0.0
  %57 = vmatpush1.msra.mxu0 0.0
  %58 = vmatprep.subr.mxu0 0.0
  %59 = vmatpush1.msra.mxu0 0.0
  %60 = vmatprep.subr.mxu0 0.0
  %61 = vmatpush1.msra.mxu0 0.0
  %62 = vmatprep.subr.mxu0 0.0
  %63 = vmatpush1.msra.mxu0 0.0
  %64 = vmatprep.subr.mxu0 0.0
  %65 = vmatpush1.msra.mxu0 0.0
  %66 = vmatprep.subr.mxu0 0.0
  %67 = vmatpush1.msra.mxu0 0.0
  %68 = vmatprep.subr.mxu0 0.0
  %69 = vmatpush1.msra.mxu0 0.0
  %70 = vmatprep.subr.mxu0 0.0
  %71 = vmatpush1.msra.mxu0 0.0
  %72 = vmatprep.subr.mxu0 0.0
  %73 = vmatpush1.msra.mxu0 0.0
  %74 = vmatprep.subr.mxu0 0.0
  %75 = vmatpush1.msra.mxu0 0.0
  %76 = vmatprep.subr.mxu0 0.0
  %77 = vmatpush1.msra.mxu0 0.0
  %78 = vmatprep.subr.mxu0 0.0
  %79 = vmatpush1.msra.mxu0 0.0
  %80 = vmatprep.subr.mxu0 0.0
  %81 = vmatpush1.msra.mxu0 0.0
  %82 = vmatprep.subr.mxu0 0.0
  %83 = vmatpush1.msra.mxu0 0.0
  %84 = vmatprep.subr.mxu0 0.0
  %85 = vmatpush1.msra.mxu0 0.0
  %86 = vmatprep.subr.mxu0 0.0
  %87 = vmatpush1.msra.mxu0 0.0
  %88 = vmatprep.subr.mxu0 0.0
  %89 = vmatpush1.msra.mxu0 0.0
  %90 = vmatprep.mubr.f32.mxu0 0.0
  %91 = vmatmul.mubr.f32.gmra.mrb[0].mxu0 %v20
  %v92 = vpop.f32.mrb[0].mxu0
  %v93 = vadd.f32 %v17, %v92
  %v94 = vpop.f32.mrb[0].mxu0
  %95 = vdwg.mxu0
  %96 = vst.msk [vmem:[%s2] sm:$0xff] %vm18, %v93
  // Predicated region
  $region10: #{tpu_custom_call.1} parent=0 // pred_check
    _
  $region11: #{tpu_custom_call.1} parent=0 // pred_check_branch
    %98 = sbr.rel (0) target = $region13
  $region12: #{tpu_custom_call.1} parent=0 // pred_region
    _
  $region13: #{tpu_custom_call.1} parent=0 // pred_fallthru
    _
  // Predicated region
  $region14: #{tpu_custom_call.1} parent=0 // pred_check
    _
  $region15: #{tpu_custom_call.1} parent=0 // pred_check_branch
    %100 = sbr.rel (0) target = $region17
  $region16: #{tpu_custom_call.1} parent=0 // pred_region
    _
  $region17: #{tpu_custom_call.1} parent=0 // pred_fallthru
    _

</llo_original>
